<compile_context>
chip_gen: v7x
topology: tpu7x:2x2x1
jax: 0.10.0
libtpu: 0.0.40
codegen_flags: <defaults>
</compile_context>

<pallas_src>
import functools

import jax
import jax.numpy as jnp
from jax import lax
from jax.experimental import pallas as pl
from jax.experimental.pallas import tpu as pltpu


def _round_up(x, m):
    return ((x + m - 1) // m) * m


# ---------------------------------------------------------------------------
# Pass 1: tiled matmul (MXU) + per-tile BatchNorm partial statistics.
#   x_ref:     (TM, Kp)  compute dtype (bf16/f32)
#   w_ref:     (Kp, Cp)  compute dtype
#   y_ref:     (TM, Cp)  stream dtype -- pre-BN conv output tile (to HBM)
#   stats_ref: (2,  Cp)  f32  -- row 0: sum(y), row 1: sum(y*y) of this tile
# ---------------------------------------------------------------------------
def _matmul_stats_kernel(x_ref, w_ref, y_ref, stats_ref):
    y = jnp.dot(x_ref[...], w_ref[...], preferred_element_type=jnp.float32)
    y_ref[...] = y.astype(y_ref.dtype)
    # Stats are taken from the exact f32 accumulator (independent of the
    # streamed dtype), so mean/var are as accurate as a full-f32 pipeline.
    stats_ref[0:1, :] = jnp.sum(y, axis=0, keepdims=True)
    stats_ref[1:2, :] = jnp.sum(y * y, axis=0, keepdims=True)


# ---------------------------------------------------------------------------
# Pass 2: per-channel affine (the folded BatchNorm)  out = y * scale + shift
# ---------------------------------------------------------------------------
def _affine_kernel(y_ref, scale_ref, shift_ref, o_ref):
    y = y_ref[...].astype(jnp.float32)
    o_ref[...] = (y * scale_ref[...] + shift_ref[...]).astype(o_ref.dtype)


def conv2d_bn(x, weight, gamma, beta, *, stride=1, padding=0, dilation=1,
              eps=1e-5, block_m=512, compute_dtype=jnp.bfloat16,
              stream_dtype=None, x_buffers=2):
    """Conv2d(bias=False) + BatchNorm2d (training-mode batch statistics).

    x:      (N, Cin, H, W)      float32, NCHW
    weight: (Cout, Cin, kh, kw) float32 (groups=1)
    gamma:  (Cout,)  beta: (Cout,)
    returns (N, Cout, Ho, Wo)   float32, NCHW
    """
    # TODO(synk): grouped / depthwise convolution (groups > 1) not implemented.
    N, Cin, H, W = x.shape
    Cout, Cin_w, kh, kw = weight.shape
    assert Cin_w == Cin, "only groups=1 supported"

    if stream_dtype is None:
        stream_dtype = compute_dtype  # halve intermediate HBM traffic on bf16

    Ho = (H + 2 * padding - dilation * (kh - 1) - 1) // stride + 1
    Wo = (W + 2 * padding - dilation * (kw - 1) - 1) // stride + 1
    M = N * Ho * Wo
    K = Cin * kh * kw

    # ---- im2col (XLA glue) ----
    # TODO(synk): fold im2col into the Pallas pipeline (kh*kw grid axis over
    # NHWC windows) to avoid materializing the kh*kw-expanded patch matrix.
    xp = jnp.pad(x, ((0, 0), (0, 0), (padding, padding), (padding, padding)))
    rows = []
    for i in range(kh):
        cols = []
        for j in range(kw):
            sl = xp[:, :,
                    i * dilation: i * dilation + stride * (Ho - 1) + 1: stride,
                    j * dilation: j * dilation + stride * (Wo - 1) + 1: stride]
            cols.append(sl)                       # (N, Cin, Ho, Wo)
        rows.append(jnp.stack(cols, axis=2))      # (N, Cin, kw, Ho, Wo)
    patches = jnp.stack(rows, axis=2)             # (N, Cin, kh, kw, Ho, Wo)
    # -> (N, Ho, Wo, Cin, kh, kw) -> (M, K), matches weight.reshape(Cout, K)
    x2d = jnp.transpose(patches, (0, 4, 5, 1, 2, 3)).reshape(M, K)
    w2d = weight.reshape(Cout, K).T               # (K, Cout)

    # ---- padding / tiling ----
    # K  : round only to the sublane multiple (block is full-extent in K, so it
    #      is exempt from the 128-lane rule) -- do NOT inflate it to 128.
    # Cout: pad to 128 so output stores are lane-dense.
    # M  : pad to the row-tile size; zero rows do not perturb the batch stats
    #      because the mean/var divide by the true M.
    k_align = 16 if jnp.dtype(compute_dtype).itemsize == 2 else 8
    Kp = _round_up(K, k_align)
    Cp = _round_up(Cout, 128)
    tm = _round_up(min(block_m, M), 16)
    Mp = _round_up(M, tm)
    grid_m = Mp // tm

    x2d = jnp.pad(x2d, ((0, Mp - M), (0, Kp - K))).astype(compute_dtype)
    w2d = jnp.pad(w2d, ((0, Kp - K), (0, Cp - Cout))).astype(compute_dtype)

    # Optional deeper input buffering (useful when K is small -> low arithmetic
    # intensity per row tile and the x2d DMA is the exposed cost).
    x_spec_kwargs = {}
    if x_buffers != 2:
        x_spec_kwargs["pipeline_mode"] = pl.Buffered(x_buffers)
    x_spec = pl.BlockSpec((tm, Kp), lambda i: (i, 0), **x_spec_kwargs)

    cparams = pltpu.CompilerParams(
        dimension_semantics=("parallel",),           # row tiles are independent
        vmem_limit_bytes=48 * 1024 * 1024)           # fits v5e/v6e/v7x budgets

    # ---- pass 1: tiled matmul + streamed BN partial statistics ----
    y2d, stats = pl.pallas_call(
        _matmul_stats_kernel,
        out_shape=(jax.ShapeDtypeStruct((Mp, Cp), stream_dtype),
                   jax.ShapeDtypeStruct((grid_m, 2, Cp), jnp.float32)),
        grid=(grid_m,),
        in_specs=[
            x_spec,
            pl.BlockSpec((Kp, Cp), lambda i: (0, 0)),   # weights stay resident
        ],
        out_specs=(
            pl.BlockSpec((tm, Cp), lambda i: (i, 0)),
            pl.BlockSpec((None, 2, Cp), lambda i: (i, 0, 0)),
        ),
        compiler_params=cparams,
    )(x2d, w2d)

    # ---- tiny glue: reduce partial stats, fold BN into scale/shift (f32) ----
    sums = jnp.sum(stats[:, 0, :], axis=0)            # (Cp,)
    sumsq = jnp.sum(stats[:, 1, :], axis=0)           # (Cp,)
    mean = sums / M
    var = jnp.maximum(sumsq / M - mean * mean, 0.0)   # biased (training) var
    gamma_p = jnp.pad(gamma.astype(jnp.float32), (0, Cp - Cout))
    beta_p = jnp.pad(beta.astype(jnp.float32), (0, Cp - Cout))
    scale = gamma_p * lax.rsqrt(var + eps)
    shift = beta_p - mean * scale

    # ---- pass 2: tiled per-channel affine ----
    out2d = pl.pallas_call(
        _affine_kernel,
        out_shape=jax.ShapeDtypeStruct((Mp, Cp), jnp.float32),
        grid=(grid_m,),
        in_specs=[
            pl.BlockSpec((tm, Cp), lambda i: (i, 0)),
            pl.BlockSpec((1, Cp), lambda i: (0, 0)),   # resident across tiles
            pl.BlockSpec((1, Cp), lambda i: (0, 0)),
        ],
        out_specs=pl.BlockSpec((tm, Cp), lambda i: (i, 0)),
        compiler_params=cparams,
    )(y2d, scale.reshape(1, Cp), shift.reshape(1, Cp))

    out = out2d[:M, :Cout].reshape(N, Ho, Wo, Cout)
    return jnp.transpose(out, (0, 3, 1, 2))           # back to NCHW


def _reference(x, weight, gamma, beta, *, stride, padding, dilation, eps,
               compute_dtype=jnp.float32):
    """Pure-JAX reference: conv (NCHW, f32 accumulation) + training-mode BN."""
    y = lax.conv_general_dilated(
        x.astype(compute_dtype), weight.astype(compute_dtype),
        window_strides=(stride, stride),
        padding=[(padding, padding), (padding, padding)],
        rhs_dilation=(dilation, dilation),
        dimension_numbers=("NCHW", "OIHW", "NCHW"),
        preferred_element_type=jnp.float32)
    mean = jnp.mean(y, axis=(0, 2, 3), keepdims=True)
    var = jnp.mean(jnp.square(y - mean), axis=(0, 2, 3), keepdims=True)
    g = gamma.reshape(1, -1, 1, 1)
    b = beta.reshape(1, -1, 1, 1)
    return (y - mean) * lax.rsqrt(var + eps) * g + b


if __name__ == "__main__":
    key = jax.random.PRNGKey(0)
    kx, kw1, kw3 = jax.random.split(key, 3)

    N, Cin, H, W = 2, 4, 16, 16
    Cout = 8
    eps = 1e-5

    x = jax.random.normal(kx, (N, Cin, H, W), dtype=jnp.float32)
    gamma = jnp.full((Cout,), 1.0, dtype=jnp.float32)   # bn_weight_init = 1
    beta = jnp.zeros((Cout,), dtype=jnp.float32)

    # Case 1: Conv2d_BN(4, 8) default -> 1x1 conv, stride 1, pad 0.
    #         f32 compute + f32 streaming, exact check vs the f32 reference.
    w1 = jax.random.normal(kw1, (Cout, Cin, 1, 1), dtype=jnp.float32) * 0.1
    out1 = jax.block_until_ready(
        conv2d_bn(x, w1, gamma, beta, stride=1, padding=0,
                  compute_dtype=jnp.float32))
    ref1 = _reference(x, w1, gamma, beta, stride=1, padding=0, dilation=1,
                      eps=eps)
    assert out1.shape == (N, Cout, H, W)
    assert jnp.allclose(out1, ref1, rtol=1e-4, atol=1e-4)

    # Case 2: 3x3, stride 1, pad 1 (typical RepViT conv), bf16 MXU path with
    #         bf16 intermediate streaming, multiple row tiles (block_m=128).
    w3 = jax.random.normal(kw3, (Cout, Cin, 3, 3), dtype=jnp.float32) * 0.1
    out2 = jax.block_until_ready(
        conv2d_bn(x, w3, gamma, beta, stride=1, padding=1, block_m=128))
    ref2_bf16 = _reference(x, w3, gamma, beta, stride=1, padding=1, dilation=1,
                           eps=eps, compute_dtype=jnp.bfloat16)
    ref2_f32 = _reference(x, w3, gamma, beta, stride=1, padding=1, dilation=1,
                          eps=eps)
    assert out2.shape == (N, Cout, H, W)
    assert jnp.allclose(out2, ref2_bf16, rtol=1e-2, atol=1e-2)
    assert jnp.allclose(out2, ref2_f32, rtol=5e-2, atol=5e-2)

    # Case 2b: same config but f32 streaming of the intermediate -> tight
    #          agreement with the bf16-input reference.
    out2b = jax.block_until_ready(
        conv2d_bn(x, w3, gamma, beta, stride=1, padding=1, block_m=128,
                  stream_dtype=jnp.float32))
    assert jnp.allclose(out2b, ref2_bf16, rtol=1e-3, atol=1e-3)

    # Case 3: 3x3, stride 2, pad 1, bf16, row tile (48) that does not divide
    #         M = 128 (padded to 144, grid of 3) to exercise the M-pad path.
    out3 = jax.block_until_ready(
        conv2d_bn(x, w3, gamma, beta, stride=2, padding=1, block_m=48))
    ref3_bf16 = _reference(x, w3, gamma, beta, stride=2, padding=1, dilation=1,
                           eps=eps, compute_dtype=jnp.bfloat16)
    assert out3.shape == (N, Cout, 8, 8)
    assert jnp.allclose(out3, ref3_bf16, rtol=1e-2, atol=1e-2)

    print("KERNEL_OK")
</pallas_src>

<mosaic_0001>
module attributes {stable_mosaic.version = 11 : i64} {
  func.func @_matmul_stats_kernel(%arg0: i32, %arg1: memref<512x8xf32, #tpu.memory_space<vmem>>, %arg2: memref<8x128xf32, #tpu.memory_space<vmem>>, %arg3: memref<512x128xf32, #tpu.memory_space<vmem>>, %arg4: memref<1x2x128xf32, #tpu.memory_space<vmem>>) attributes {dimension_semantics = [#tpu.dimension_semantics<parallel>], iteration_bounds = array<i64: 1>, scalar_prefetch = 0 : i64, scratch_operands = 0 : i64, tpu.core_type = #tpu.core_type<tc>, window_params = [{transform_indices = @transform_0, window_bounds = array<i64: 512, 8>}, {pipeline_mode = #tpu.pipeline_mode<synchronous>, transform_indices = @transform_1, window_bounds = array<i64: 8, 128>}, {transform_indices = @transform_2, window_bounds = array<i64: 512, 128>}, {transform_indices = @transform_3, window_bounds = array<i64: 1, 2, 128>}]} {
    %c0 = arith.constant 0 : index
    %c0_0 = arith.constant 0 : index
    %0 = vector.load %arg1[%c0, %c0_0] : memref<512x8xf32, #tpu.memory_space<vmem>>, vector<512x8xf32>
    %c0_1 = arith.constant 0 : index
    %c0_2 = arith.constant 0 : index
    %1 = vector.load %arg2[%c0_1, %c0_2] : memref<8x128xf32, #tpu.memory_space<vmem>>, vector<8x128xf32>
    %cst = arith.constant dense<0.000000e+00> : vector<512x128xf32>
    %2 = tpu.matmul %0, %1, %cst {dimension_numbers = #tpu.dot_dimension_numbers<[1], [0], [0], [1], [0, 0, 1, 1], [], []>} : vector<512x8xf32>, vector<8x128xf32>, vector<512x128xf32> -> vector<512x128xf32>
    %c0_3 = arith.constant 0 : index
    %c0_4 = arith.constant 0 : index
    %3 = vector.load %arg3[%c0_3, %c0_4] : memref<512x128xf32, #tpu.memory_space<vmem>>, vector<512x128xf32>
    tpu.vector_store %arg3[%c0_3, %c0_4], %2 {strides = array<i32>} : memref<512x128xf32, #tpu.memory_space<vmem>>, vector<512x128xf32>,
    %cst_5 = arith.constant dense<0.000000e+00> : vector<128xf32>
    %4 = vector.multi_reduction <add>, %2, %cst_5 [0] : vector<512x128xf32> to vector<128xf32>
    %5 = vector.shape_cast %4 : vector<128xf32> to vector<1x128xf32>
    %c0_6 = arith.constant 0 : index
    %c0_7 = arith.constant 0 : index
    %c0_8 = arith.constant 0 : index
    %6 = vector.load %arg4[%c0_6, %c0_7, %c0_8] : memref<1x2x128xf32, #tpu.memory_space<vmem>>, vector<1x1x128xf32>
    %7 = vector.shape_cast %6 : vector<1x1x128xf32> to vector<1x128xf32>
    %8 = vector.shape_cast %5 : vector<1x128xf32> to vector<1x1x128xf32>
    tpu.vector_store %arg4[%c0_6, %c0_7, %c0_8], %8 {strides = array<i32>} : memref<1x2x128xf32, #tpu.memory_space<vmem>>, vector<1x1x128xf32>,
    %9 = arith.mulf %2, %2 : vector<512x128xf32>
    %cst_9 = arith.constant dense<0.000000e+00> : vector<128xf32>
    %10 = vector.multi_reduction <add>, %9, %cst_9 [0] : vector<512x128xf32> to vector<128xf32>
    %11 = vector.shape_cast %10 : vector<128xf32> to vector<1x128xf32>
    %c0_10 = arith.constant 0 : index
    %c1 = arith.constant 1 : index
    %c0_11 = arith.constant 0 : index
    %12 = vector.load %arg4[%c0_10, %c1, %c0_11] : memref<1x2x128xf32, #tpu.memory_space<vmem>>, vector<1x1x128xf32>
    %13 = vector.shape_cast %12 : vector<1x1x128xf32> to vector<1x128xf32>
    %14 = vector.shape_cast %11 : vector<1x128xf32> to vector<1x1x128xf32>
    tpu.vector_store %arg4[%c0_10, %c1, %c0_11], %14 {strides = array<i32>} : memref<1x2x128xf32, #tpu.memory_space<vmem>>, vector<1x1x128xf32>,
    return
  }
  func.func @transform_0(%arg0: i32) -> (i32, i32) {
    %c0_i32 = arith.constant 0 : i32
    %c0_i32_0 = arith.constant 0 : i32
    return %arg0, %c0_i32 : i32, i32
  }
  func.func @transform_1(%arg0: i32) -> (i32, i32) {
    %c0_i32 = arith.constant 0 : i32
    %c0_i32_0 = arith.constant 0 : i32
    %c0_i32_1 = arith.constant 0 : i32
    return %c0_i32, %c0_i32_0 : i32, i32
  }
  func.func @transform_2(%arg0: i32) -> (i32, i32) {
    %c0_i32 = arith.constant 0 : i32
    %c0_i32_0 = arith.constant 0 : i32
    return %arg0, %c0_i32 : i32, i32
  }
  func.func @transform_3(%arg0: i32) -> (i32, i32, i32) {
    %c0_i32 = arith.constant 0 : i32
    %c0_i32_0 = arith.constant 0 : i32
    %c0_i32_1 = arith.constant 0 : i32
    return %arg0, %c0_i32, %c0_i32_0 : i32, i32, i32
  }
}

</mosaic_0001>

<llo_original>
// kernel: tpu_custom_call.1
$region0: #{tpu_custom_call.1}
  #allocation0 [shape = 'u32[]', space=smem, size = 0x4, offset = 0x4, fixed_abs, tag = 'smem constant byte address 0x4 - core index']
  #allocation1 [shape = 'u32[144,128]{1,0:T(1,128)}', space=vmem, size = 0x12000, scoped, tag = 'internal scratch']
  %s0 = inlined_call_operand.vmem [shape: f32[512,8], index: 0, kind: input, shape index: {}]
  %s1 = inlined_call_operand.vmem [shape: f32[8,128], index: 1, kind: input, shape index: {}]
  %s2 = inlined_call_operand.hbm [shape: f32[512,128], index: 2, kind: output, shape index: {0}]
  %s3 = inlined_call_operand.hbm [shape: f32[1,2,128], index: 3, kind: output, shape index: {1}]
  %4 = xla_tuple %s2, %s3
  %s5 = sld [smem:[#allocation0]]
  $region26: #{tpu_custom_call.1} parent=0
    _
  %s7 = ssub.s32 1, %s5
  %s8 = scalar_select 0, %s7, %s5
  $region1: #{tpu_custom_call.1} parent=0
    #allocation2 [shape = 'u8[262144]{0}', space=vmem, size = 0x40000, scoped, tag = 'output window, operand 0, single buffered']
    #allocation3 [shape = 's32[1]{0}', space=sflag, size = 0x4, scoped, tag = 'scoped memory for tpu_custom_call.1']
    #allocation4 [shape = 'u8[1024]{0}', space=vmem, size = 0x400, scoped, tag = 'output window, operand 1, single buffered']
    #allocation5 [shape = 's32[1]{0}', space=sflag, size = 0x4, scoped, tag = 'scoped memory for tpu_custom_call.1']
    %9 = vsyncpa [#allocation3], 0
    %10 = vsyncpa [#allocation5], 0
    // Predicated region
    $region2: #{tpu_custom_call.1} parent=1 // pred_check
      _
    $region3: #{tpu_custom_call.1} parent=1 // pred_check_branch
      %12 = sbr.rel (0) target = $region5
    $region4: #{tpu_custom_call.1} parent=1 // pred_region
      _
    $region5: #{tpu_custom_call.1} parent=1 // pred_fallthru
      _
    // Predicated region
    $region6: #{tpu_custom_call.1} parent=1 // pred_check
      _
    $region7: #{tpu_custom_call.1} parent=1 // pred_check_branch
      %14 = sbr.rel (0) target = $region9
    $region8: #{tpu_custom_call.1} parent=1 // pred_region
      _
    $region9: #{tpu_custom_call.1} parent=1 // pred_fallthru
      _
    %v15 = vld [vmem:[%s0] sm:$0xff]
    %v16 = vld [vmem:[%s0 + $0x8] sm:$0xff]
    %v17 = vld [vmem:[%s0 + $0x10] sm:$0xff]
    %v18 = vld [vmem:[%s0 + $0x18] sm:$0xff]
    %v19 = vld [vmem:[%s0 + $0x20] sm:$0xff]
    %v20 = vld [vmem:[%s0 + $0x28] sm:$0xff]
    %v21 = vld [vmem:[%s0 + $0x30] sm:$0xff]
    %v22 = vld [vmem:[%s0 + $0x38] sm:$0xff]
    %v23 = vld [vmem:[%s0 + $0x40] sm:$0xff]
    %v24 = vld [vmem:[%s0 + $0x48] sm:$0xff]
    %v25 = vld [vmem:[%s0 + $0x50] sm:$0xff]
    %v26 = vld [vmem:[%s0 + $0x58] sm:$0xff]
    %v27 = vld [vmem:[%s0 + $0x60] sm:$0xff]
    %v28 = vld [vmem:[%s0 + $0x68] sm:$0xff]
    %v29 = vld [vmem:[%s0 + $0x70] sm:$0xff]
    %v30 = vld [vmem:[%s0 + $0x78] sm:$0xff]
    %v31 = vld [vmem:[%s0 + $0x80] sm:$0xff]
    %v32 = vld [vmem:[%s0 + $0x88] sm:$0xff]
    %v33 = vld [vmem:[%s0 + $0x90] sm:$0xff]
    %v34 = vld [vmem:[%s0 + $0x98] sm:$0xff]
    %v35 = vld [vmem:[%s0 + $0xa0] sm:$0xff]
    %v36 = vld [vmem:[%s0 + $0xa8] sm:$0xff]
    %v37 = vld [vmem:[%s0 + $0xb0] sm:$0xff]
    %v38 = vld [vmem:[%s0 + $0xb8] sm:$0xff]
    %v39 = vld [vmem:[%s0 + $0xc0] sm:$0xff]
    %v40 = vld [vmem:[%s0 + $0xc8] sm:$0xff]
    %v41 = vld [vmem:[%s0 + $0xd0] sm:$0xff]
    %v42 = vld [vmem:[%s0 + $0xd8] sm:$0xff]
    %v43 = vld [vmem:[%s0 + $0xe0] sm:$0xff]
    %v44 = vld [vmem:[%s0 + $0xe8] sm:$0xff]
    %v45 = vld [vmem:[%s0 + $0xf0] sm:$0xff]
    %v46 = vld [vmem:[%s0 + $0xf8] sm:$0xff]
    %v47 = vld [vmem:[%s0 + $0x100] sm:$0xff]
    %v48 = vld [vmem:[%s0 + $0x108] sm:$0xff]
    %v49 = vld [vmem:[%s0 + $0x110] sm:$0xff]
    %v50 = vld [vmem:[%s0 + $0x118] sm:$0xff]
    %v51 = vld [vmem:[%s0 + $0x120] sm:$0xff]
    %v52 = vld [vmem:[%s0 + $0x128] sm:$0xff]
    %v53 = vld [vmem:[%s0 + $0x130] sm:$0xff]
    %v54 = vld [vmem:[%s0 + $0x138] sm:$0xff]
    %v55 = vld [vmem:[%s0 + $0x140] sm:$0xff]
    %v56 = vld [vmem:[%s0 + $0x148] sm:$0xff]
    %v57 = vld [vmem:[%s0 + $0x150] sm:$0xff]
    %v58 = vld [vmem:[%s0 + $0x158] sm:$0xff]
    %v59 = vld [vmem:[%s0 + $0x160] sm:$0xff]
    %v60 = vld [vmem:[%s0 + $0x168] sm:$0xff]
    %v61 = vld [vmem:[%s0 + $0x170] sm:$0xff]
    %v62 = vld [vmem:[%s0 + $0x178] sm:$0xff]
    %v63 = vld [vmem:[%s0 + $0x180] sm:$0xff]
    %v64 = vld [vmem:[%s0 + $0x188] sm:$0xff]
    %v65 = vld [vmem:[%s0 + $0x190] sm:$0xff]
    %v66 = vld [vmem:[%s0 + $0x198] sm:$0xff]
    %v67 = vld [vmem:[%s0 + $0x1a0] sm:$0xff]
    %v68 = vld [vmem:[%s0 + $0x1a8] sm:$0xff]
    %v69 = vld [vmem:[%s0 + $0x1b0] sm:$0xff]
    %v70 = vld [vmem:[%s0 + $0x1b8] sm:$0xff]
    %v71 = vld [vmem:[%s0 + $0x1c0] sm:$0xff]
    %v72 = vld [vmem:[%s0 + $0x1c8] sm:$0xff]
    %v73 = vld [vmem:[%s0 + $0x1d0] sm:$0xff]
    %v74 = vld [vmem:[%s0 + $0x1d8] sm:$0xff]
    %v75 = vld [vmem:[%s0 + $0x1e0] sm:$0xff]
    %v76 = vld [vmem:[%s0 + $0x1e8] sm:$0xff]
    %v77 = vld [vmem:[%s0 + $0x1f0] sm:$0xff]
    %v78 = vld [vmem:[%s0 + $0x1f8] sm:$0xff]
    %v79 = vld [vmem:[%s1] sm:$0xff]
    %vm80 = vcmask 64512
    %v82 = vsel %vm80, %v15, 0
    %v85 = vsel %vm80, %v16, 0
    %v88 = vsel %vm80, %v17, 0
    %v91 = vsel %vm80, %v18, 0
    %v94 = vsel %vm80, %v19, 0
    %v97 = vsel %vm80, %v20, 0
    %v100 = vsel %vm80, %v21, 0
    %v103 = vsel %vm80, %v22, 0
    %v106 = vsel %vm80, %v23, 0
    %v109 = vsel %vm80, %v24, 0
    %v112 = vsel %vm80, %v25, 0
    %v115 = vsel %vm80, %v26, 0
    %v118 = vsel %vm80, %v27, 0
    %v121 = vsel %vm80, %v28, 0
    %v124 = vsel %vm80, %v29, 0
    %v127 = vsel %vm80, %v30, 0
    %v130 = vsel %vm80, %v31, 0
    %v133 = vsel %vm80, %v32, 0
    %v136 = vsel %vm80, %v33, 0
    %v139 = vsel %vm80, %v34, 0
    %v142 = vsel %vm80, %v35, 0
    %v145 = vsel %vm80, %v36, 0
    %v148 = vsel %vm80, %v37, 0
    %v151 = vsel %vm80, %v38, 0
    %v154 = vsel %vm80, %v39, 0
    %v157 = vsel %vm80, %v40, 0
    %v160 = vsel %vm80, %v41, 0
    %v163 = vsel %vm80, %v42, 0
    %v166 = vsel %vm80, %v43, 0
    %v169 = vsel %vm80, %v44, 0
    %v172 = vsel %vm80, %v45, 0
    %v175 = vsel %vm80, %v46, 0
    %v178 = vsel %vm80, %v47, 0
    %v181 = vsel %vm80, %v48, 0
    %v184 = vsel %vm80, %v49, 0
    %v187 = vsel %vm80, %v50, 0
    %v190 = vsel %vm80, %v51, 0
    %v193 = vsel %vm80, %v52, 0
    %v196 = vsel %vm80, %v53, 0
    %v199 = vsel %vm80, %v54, 0
    %v202 = vsel %vm80, %v55, 0
    %v205 = vsel %vm80, %v56, 0
    %v208 = vsel %vm80, %v57, 0
    %v211 = vsel %vm80, %v58, 0
    %v214 = vsel %vm80, %v59, 0
    %v217 = vsel %vm80, %v60, 0
    %v220 = vsel %vm80, %v61, 0
    %v223 = vsel %vm80, %v62, 0
    %v226 = vsel %vm80, %v63, 0
    %v229 = vsel %vm80, %v64, 0
    %v232 = vsel %vm80, %v65, 0
    %v235 = vsel %vm80, %v66, 0
    %v238 = vsel %vm80, %v67, 0
    %v241 = vsel %vm80, %v68, 0
    %v244 = vsel %vm80, %v69, 0
    %v247 = vsel %vm80, %v70, 0
    %v250 = vsel %vm80, %v71, 0
    %v253 = vsel %vm80, %v72, 0
    %v256 = vsel %vm80, %v73, 0
    %v259 = vsel %vm80, %v74, 0
    %v262 = vsel %vm80, %v75, 0
    %v265 = vsel %vm80, %v76, 0
    %v268 = vsel %vm80, %v77, 0
    %v271 = vsel %vm80, %v78, 0
    %273 = vmatprep.subr.mxu0 0.0
    %274 = vmatpush1.msra.mxu0 %v79
    %275 = vmatprep.subr.mxu0 0.0
    %276 = vmatpush1.msra.mxu0 0.0
    %277 = vmatprep.subr.mxu0 0.0
    %278 = vmatpush1.msra.mxu0 0.0
    %279 = vmatprep.subr.mxu0 0.0
    %280 = vmatpush1.msra.mxu0 0.0
    %281 = vmatprep.subr.mxu0 0.0
    %282 = vmatpush1.msra.mxu0 0.0
    %283 = vmatprep.subr.mxu0 0.0
    %284 = vmatpush1.msra.mxu0 0.0
    %285 = vmatprep.subr.mxu0 0.0
    %286 = vmatpush1.msra.mxu0 0.0
    %287 = vmatprep.subr.mxu0 0.0
    %288 = vmatpush1.msra.mxu0 0.0
    %289 = vmatprep.subr.mxu0 0.0
    %290 = vmatpush1.msra.mxu0 0.0
    %291 = vmatprep.subr.mxu0 0.0
    %292 = vmatpush1.msra.mxu0 0.0
    %293 = vmatprep.subr.mxu0 0.0
    %294 = vmatpush1.msra.mxu0 0.0
    %295 = vmatprep.subr.mxu0 0.0
    %296 = vmatpush1.msra.mxu0 0.0
    %297 = vmatprep.subr.mxu0 0.0
    %298 = vmatpush1.msra.mxu0 0.0
    %299 = vmatprep.subr.mxu0 0.0
    %300 = vmatpush1.msra.mxu0 0.0
    %301 = vmatprep.subr.mxu0 0.0
    %302 = vmatpush1.msra.mxu0 0.0
    %303 = vmatprep.subr.mxu0 0.0
    %304 = vmatpush1.msra.mxu0 0.0
    %305 = vmatprep.subr.mxu0 0.0
    %306 = vmatpush1.msra.mxu0 0.0
    %307 = vmatprep.subr.mxu0 0.0
    %308 = vmatpush1.msra.mxu0 0.0
    %309 = vmatprep.subr.mxu0 0.0
    %310 = vmatpush1.msra.mxu0 0.0
    %311 = vmatprep.subr.mxu0 0.0
    %312 = vmatpush1.msra.mxu0 0.0
    %313 = vmatprep.subr.mxu0 0.0
    %314 = vmatpush1.msra.mxu0 0.0
    %315 = vmatprep.subr.mxu0 0.0
    %316 = vmatpush1.msra.mxu0 0.0
    %317 = vmatprep.subr.mxu0 0.0
    %318 = vmatpush1.msra.mxu0 0.0
    %319 = vmatprep.subr.mxu0 0.0
    %320 = vmatpush1.msra.mxu0 0.0
    %321 = vmatprep.subr.mxu0 0.0
    %322 = vmatpush1.msra.mxu0 0.0
    %323 = vmatprep.subr.mxu0 0.0
    %324 = vmatpush1.msra.mxu0 0.0
    %325 = vmatprep.subr.mxu0 0.0
    %326 = vmatpush1.msra.mxu0 0.0
    %327 = vmatprep.subr.mxu0 0.0
    %328 = vmatpush1.msra.mxu0 0.0
    %329 = vmatprep.subr.mxu0 0.0
    %330 = vmatpush1.msra.mxu0 0.0
    %331 = vmatprep.subr.mxu0 0.0
    %332 = vmatpush1.msra.mxu0 0.0
    %333 = vmatprep.subr.mxu0 0.0
    %334 = vmatpush1.msra.mxu0 0.0
    %335 = vmatprep.subr.mxu0 0.0
    %336 = vmatpush1.msra.mxu0 0.0
    %337 = vmatprep.mubr.f32.mxu0 0.0
    %338 = vmatmul.mubr.f32.gmra.mrb[0].mxu0 %v82
    %v339 = vpop.f32.mrb[0].mxu0
    %v340 = vadd.f32 0.0, %v339
    %v341 = vpop.f32.mrb[0].mxu0
    %342 = vmatprep.mubr.f32.mxu0 0.0
    %343 = vmatmul.mubr.f32.gmra.mrb[0].mxu0 %v85
    %v344 = vpop.f32.mrb[0].mxu0
    %v345 = vadd.f32 0.0, %v344
    %v346 = vpop.f32.mrb[0].mxu0
    %347 = vmatprep.mubr.f32.mxu0 0.0
    %348 = vmatmul.mubr.f32.gmra.mrb[0].mxu0 %v88
    %v349 = vpop.f32.mrb[0].mxu0
    %v350 = vadd.f32 0.0, %v349
    %v351 = vpop.f32.mrb[0].mxu0
    %352 = vmatprep.mubr.f32.mxu0 0.0
    %353 = vmatmul.mubr.f32.gmra.mrb[0].mxu0 %v91
    %v354 = vpop.f32.mrb[0].mxu0
    %v355 = vadd.f32 0.0, %v354
    %v356 = vpop.f32.mrb[0].mxu0
    %357 = vmatprep.mubr.f32.mxu0 0.0
    %358 = vmatmul.mubr.f32.gmra.mrb[0].mxu0 %v94
    %v359 = vpop.f32.mrb[0].mxu0
    %v360 = vadd.f32 0.0, %v359
    %v361 = vpop.f32.mrb[0].mxu0
    %362 = vmatprep.mubr.f32.mxu0 0.0
    %363 = vmatmul.mubr.f32.gmra.mrb[0].mxu0 %v97
    %v364 = vpop.f32.mrb[0].mxu0
    %v365 = vadd.f32 0.0, %v364
    %v366 = vpop.f32.mrb[0].mxu0
    %367 = vmatprep.mubr.f32.mxu0 0.0
    %368 = vmatmul.mubr.f32.gmra.mrb[0].mxu0 %v100
    %v369 = vpop.f32.mrb[0].mxu0
    %v370 = vadd.f32 0.0, %v369
    %v371 = vpop.f32.mrb[0].mxu0
    %372 = vmatprep.mubr.f32.mxu0 0.0
    %373 = vmatmul.mubr.f32.gmra.mrb[0].mxu0 %v103
    %v374 = vpop.f32.mrb[0].mxu0
    %v375 = vadd.f32 0.0, %v374
    %v376 = vpop.f32.mrb[0].mxu0
    %377 = vmatprep.mubr.f32.mxu0 0.0
    %378 = vmatmul.mubr.f32.gmra.mrb[0].mxu0 %v106
    %v379 = vpop.f32.mrb[0].mxu0
    %v380 = vadd.f32 0.0, %v379
    %v381 = vpop.f32.mrb[0].mxu0
    %382 = vmatprep.mubr.f32.mxu0 0.0
    %383 = vmatmul.mubr.f32.gmra.mrb[0].mxu0 %v109
    %v384 = vpop.f32.mrb[0].mxu0
    %v385 = vadd.f32 0.0, %v384
    %v386 = vpop.f32.mrb[0].mxu0
    %387 = vmatprep.mubr.f32.mxu0 0.0
    %388 = vmatmul.mubr.f32.gmra.mrb[0].mxu0 %v112
    %v389 = vpop.f32.mrb[0].mxu0
    %v390 = vadd.f32 0.0, %v389
    %v391 = vpop.f32.mrb[0].mxu0
    %392 = vmatprep.mubr.f32.mxu0 0.0
    %393 = vmatmul.mubr.f32.gmra.mrb[0].mxu0 %v115
    %v394 = vpop.f32.mrb[0].mxu0
    %v395 = vadd.f32 0.0, %v394
    %v396 = vpop.f32.mrb[0].mxu0
    %397 = vmatprep.mubr.f32.mxu0 0.0
    %398 = vmatmul.mubr.f32.gmra.mrb[0].mxu0 %v118
    %v399 = vpop.f32.mrb[0].mxu0
    %v400 = vadd.f32 0.0, %v399
    %v401 = vpop.f32.mrb[0].mxu0
    %402 = vmatprep.mubr.f32.mxu0 0.0
    %403 = vmatmul.mubr.f32.gmra.mrb[0].mxu0 %v121
    %v404 = vpop.f32.mrb[0].mxu0
    %v405 = vadd.f32 0.0, %v404
    %v406 = vpop.f32.mrb[0].mxu0
    %407 = vmatprep.mubr.f32.mxu0 0.0
    %408 = vmatmul.mubr.f32.gmra.mrb[0].mxu0 %v124
    %v409 = vpop.f32.mrb[0].mxu0
    %v410 = vadd.f32 0.0, %v409
    %v411 = vpop.f32.mrb[0].mxu0
    %412 = vmatprep.mubr.f32.mxu0 0.0
    %413 = vmatmul.mubr.f32.gmra.mrb[0].mxu0 %v127
    %v414 = vpop.f32.mrb[0].mxu0
    %v415 = vadd.f32 0.0, %v414
    %v416 = vpop.f32.mrb[0].mxu0
    %417 = vmatprep.mubr.f32.mxu0 0.0
    %418 = vmatmul.mubr.f32.gmra.mrb[0].mxu0 %v130
    %v419 = vpop.f32.mrb[0].mxu0
    %v420 = vadd.f32 0.0, %v419
    %v421 = vpop.f32.mrb[0].mxu0
    %422 = vmatprep.mubr.f32.mxu0 0.0
    %423 = vmatmul.mubr.f32.gmra.mrb[0].mxu0 %v133
    %v424 = vpop.f32.mrb[0].mxu0
    %v425 = vadd.f32 0.0, %v424
    %v426 = vpop.f32.mrb[0].mxu0
    %427 = vmatprep.mubr.f32.mxu0 0.0
    %428 = vmatmul.mubr.f32.gmra.mrb[0].mxu0 %v136
    %v429 = vpop.f32.mrb[0].mxu0
    %v430 = vadd.f32 0.0, %v429
    %v431 = vpop.f32.mrb[0].mxu0
    %432 = vmatprep.mubr.f32.mxu0 0.0
    %433 = vmatmul.mubr.f32.gmra.mrb[0].mxu0 %v139
    %v434 = vpop.f32.mrb[0].mxu0
    %v435 = vadd.f32 0.0, %v434
    %v436 = vpop.f32.mrb[0].mxu0
    %437 = vmatprep.mubr.f32.mxu0 0.0
    %438 = vmatmul.mubr.f32.gmra.mrb[0].mxu0 %v142
    %v439 = vpop.f32.mrb[0].mxu0
    %v440 = vadd.f32 0.0, %v439
    %v441 = vpop.f32.mrb[0].mxu0
    %442 = vmatprep.mubr.f32.mxu0 0.0
    %443 = vmatmul.mubr.f32.gmra.mrb[0].mxu0 %v145
    %v444 = vpop.f32.mrb[0].mxu0
    %v445 = vadd.f32 0.0, %v444
    %v446 = vpop.f32.mrb[0].mxu0
    %447 = vmatprep.mubr.f32.mxu0 0.0
    %448 = vmatmul.mubr.f32.gmra.mrb[0].mxu0 %v148
    %v449 = vpop.f32.mrb[0].mxu0
    %v450 = vadd.f32 0.0, %v449
    %v451 = vpop.f32.mrb[0].mxu0
    %452 = vmatprep.mubr.f32.mxu0 0.0
    %453 = vmatmul.mubr.f32.gmra.mrb[0].mxu0 %v151
    %v454 = vpop.f32.mrb[0].mxu0
    %v455 = vadd.f32 0.0, %v454
    %v456 = vpop.f32.mrb[0].mxu0
    %457 = vmatprep.mubr.f32.mxu0 0.0
    %458 = vmatmul.mubr.f32.gmra.mrb[0].mxu0 %v154
    %v459 = vpop.f32.mrb[0].mxu0
    %v460 = vadd.f32 0.0, %v459
    %v461 = vpop.f32.mrb[0].mxu0
    %462 = vmatprep.mubr.f32.mxu0 0.0
    %463 = vmatmul.mubr.f32.gmra.mrb[0].mxu0 %v157
    %v464 = vpop.f32.mrb[0].mxu0
    %v465 = vadd.f32 0.0, %v464
    %v466 = vpop.f32.mrb[0].mxu0
    %467 = vmatprep.mubr.f32.mxu0 0.0
    %468 = vmatmul.mubr.f32.gmra.mrb[0].mxu0 %v160
    %v469 = vpop.f32.mrb[0].mxu0
    %v470 = vadd.f32 0.0, %v469
    %v471 = vpop.f32.mrb[0].mxu0
    %472 = vmatprep.mubr.f32.mxu0 0.0
    %473 = vmatmul.mubr.f32.gmra.mrb[0].mxu0 %v163
    %v474 = vpop.f32.mrb[0].mxu0
    %v475 = vadd.f32 0.0, %v474
    %v476 = vpop.f32.mrb[0].mxu0
    %477 = vmatprep.mubr.f32.mxu0 0.0
    %478 = vmatmul.mubr.f32.gmra.mrb[0].mxu0 %v166
    %v479 = vpop.f32.mrb[0].mxu0
    %v480 = vadd.f32 0.0, %v479
    %v481 = vpop.f32.mrb[0].mxu0
    %482 = vmatprep.mubr.f32.mxu0 0.0
    %483 = vmatmul.mubr.f32.gmra.mrb[0].mxu0 %v169
    %v484 = vpop.f32.mrb[0].mxu0
    %v485 = vadd.f32 0.0, %v484
    %v486 = vpop.f32.mrb[0].mxu0
    %487 = vmatprep.mubr.f32.mxu0 0.0
    %488 = vmatmul.mubr.f32.gmra.mrb[0].mxu0 %v172
    %v489 = vpop.f32.mrb[0].mxu0
    %v490 = vadd.f32 0.0, %v489
    %v491 = vpop.f32.mrb[0].mxu0
    %492 = vmatprep.mubr.f32.mxu0 0.0
    %493 = vmatmul.mubr.f32.gmra.mrb[0].mxu0 %v175
    %v494 = vpop.f32.mrb[0].mxu0
    %v495 = vadd.f32 0.0, %v494
    %v496 = vpop.f32.mrb[0].mxu0
    %497 = vmatprep.mubr.f32.mxu0 0.0
    %498 = vmatmul.mubr.f32.gmra.mrb[0].mxu0 %v178
    %v499 = vpop.f32.mrb[0].mxu0
    %v500 = vadd.f32 0.0, %v499
    %v501 = vpop.f32.mrb[0].mxu0
    %502 = vmatprep.mubr.f32.mxu0 0.0
    %503 = vmatmul.mubr.f32.gmra.mrb[0].mxu0 %v181
    %v504 = vpop.f32.mrb[0].mxu0
    %v505 = vadd.f32 0.0, %v504
    %v506 = vpop.f32.mrb[0].mxu0
    %507 = vmatprep.mubr.f32.mxu0 0.0
    %508 = vmatmul.mubr.f32.gmra.mrb[0].mxu0 %v184
    %v509 = vpop.f32.mrb[0].mxu0
    %v510 = vadd.f32 0.0, %v509
    %v511 = vpop.f32.mrb[0].mxu0
    %512 = vmatprep.mubr.f32.mxu0 0.0
    %513 = vmatmul.mubr.f32.gmra.mrb[0].mxu0 %v187
    %v514 = vpop.f32.mrb[0].mxu0
    %v515 = vadd.f32 0.0, %v514
    %v516 = vpop.f32.mrb[0].mxu0
    %517 = vmatprep.mubr.f32.mxu0 0.0
    %518 = vmatmul.mubr.f32.gmra.mrb[0].mxu0 %v190
    %v519 = vpop.f32.mrb[0].mxu0
    %v520 = vadd.f32 0.0, %v519
    %v521 = vpop.f32.mrb[0].mxu0
    %522 = vmatprep.mubr.f32.mxu0 0.0
    %523 = vmatmul.mubr.f32.gmra.mrb[0].mxu0 %v193
    %v524 = vpop.f32.mrb[0].mxu0
    %v525 = vadd.f32 0.0, %v524
    %v526 = vpop.f32.mrb[0].mxu0
    %527 = vmatprep.mubr.f32.mxu0 0.0
    %528 = vmatmul.mubr.f32.gmra.mrb[0].mxu0 %v196
    %v529 = vpop.f32.mrb[0].mxu0
    %v530 = vadd.f32 0.0, %v529
    %v531 = vpop.f32.mrb[0].mxu0
    %532 = vmatprep.mubr.f32.mxu0 0.0
    %533 = vmatmul.mubr.f32.gmra.mrb[0].mxu0 %v199
    %v534 = vpop.f32.mrb[0].mxu0
    %v535 = vadd.f32 0.0, %v534
    %v536 = vpop.f32.mrb[0].mxu0
    %537 = vmatprep.mubr.f32.mxu0 0.0
    %538 = vmatmul.mubr.f32.gmra.mrb[0].mxu0 %v202
    %v539 = vpop.f32.mrb[0].mxu0
    %v540 = vadd.f32 0.0, %v539
    %v541 = vpop.f32.mrb[0].mxu0
    %542 = vmatprep.mubr.f32.mxu0 0.0
    %543 = vmatmul.mubr.f32.gmra.mrb[0].mxu0 %v205
    %v544 = vpop.f32.mrb[0].mxu0
    %v545 = vadd.f32 0.0, %v544
    %v546 = vpop.f32.mrb[0].mxu0
    %547 = vmatprep.mubr.f32.mxu0 0.0
    %548 = vmatmul.mubr.f32.gmra.mrb[0].mxu0 %v208
    %v549 = vpop.f32.mrb[0].mxu0
    %v550 = vadd.f32 0.0, %v549
    %v551 = vpop.f32.mrb[0].mxu0
    %552 = vmatprep.mubr.f32.mxu0 0.0
    %553 = vmatmul.mubr.f32.gmra.mrb[0].mxu0 %v211
    %v554 = vpop.f32.mrb[0].mxu0
    %v555 = vadd.f32 0.0, %v554
    %v556 = vpop.f32.mrb[0].mxu0
    %557 = vmatprep.mubr.f32.mxu0 0.0
    %558 = vmatmul.mubr.f32.gmra.mrb[0].mxu0 %v214
    %v559 = vpop.f32.mrb[0].mxu0
    %v560 = vadd.f32 0.0, %v559
    %v561 = vpop.f32.mrb[0].mxu0
    %562 = vmatprep.mubr.f32.mxu0 0.0
    %563 = vmatmul.mubr.f32.gmra.mrb[0].mxu0 %v217
    %v564 = vpop.f32.mrb[0].mxu0
    %v565 = vadd.f32 0.0, %v564
    %v566 = vpop.f32.mrb[0].mxu0
    %567 = vmatprep.mubr.f32.mxu0 0.0
    %568 = vmatmul.mubr.f32.gmra.mrb[0].mxu0 %v220
    %v569 = vpop.f32.mrb[0].mxu0
    %v570 = vadd.f32 0.0, %v569
    %v571 = vpop.f32.mrb[0].mxu0
    %572 = vmatprep.mubr.f32.mxu0 0.0
    %573 = vmatmul.mubr.f32.gmra.mrb[0].mxu0 %v223
    %v574 = vpop.f32.mrb[0].mxu0
    %v575 = vadd.f32 0.0, %v574
    %v576 = vpop.f32.mrb[0].mxu0
    %577 = vmatprep.mubr.f32.mxu0 0.0
    %578 = vmatmul.mubr.f32.gmra.mrb[0].mxu0 %v226
    %v579 = vpop.f32.mrb[0].mxu0
    %v580 = vadd.f32 0.0, %v579
    %v581 = vpop.f32.mrb[0].mxu0
    %582 = vmatprep.mubr.f32.mxu0 0.0
    %583 = vmatmul.mubr.f32.gmra.mrb[0].mxu0 %v229
    %v584 = vpop.f32.mrb[0].mxu0
    %v585 = vadd.f32 0.0, %v584
    %v586 = vpop.f32.mrb[0].mxu0
    %587 = vmatprep.mubr.f32.mxu0 0.0
    %588 = vmatmul.mubr.f32.gmra.mrb[0].mxu0 %v232
    %v589 = vpop.f32.mrb[0].mxu0
    %v590 = vadd.f32 0.0, %v589
    %v591 = vpop.f32.mrb[0].mxu0
    %592 = vmatprep.mubr.f32.mxu0 0.0
    %593 = vmatmul.mubr.f32.gmra.mrb[0].mxu0 %v235
    %v594 = vpop.f32.mrb[0].mxu0
    %v595 = vadd.f32 0.0, %v594
    %v596 = vpop.f32.mrb[0].mxu0
    %597 = vmatprep.mubr.f32.mxu0 0.0
    %598 = vmatmul.mubr.f32.gmra.mrb[0].mxu0 %v238
    %v599 = vpop.f32.mrb[0].mxu0
    %v600 = vadd.f32 0.0, %v599
    %v601 = vpop.f32.mrb[0].mxu0
    %602 = vmatprep.mubr.f32.mxu0 0.0
    %603 = vmatmul.mubr.f32.gmra.mrb[0].mxu0 %v241
    %v604 = vpop.f32.mrb[0].mxu0
    %v605 = vadd.f32 0.0, %v604
    %v606 = vpop.f32.mrb[0].mxu0
    %607 = vmatprep.mubr.f32.mxu0 0.0
    %608 = vmatmul.mubr.f32.gmra.mrb[0].mxu0 %v244
    %v609 = vpop.f32.mrb[0].mxu0
    %v610 = vadd.f32 0.0, %v609
    %v611 = vpop.f32.mrb[0].mxu0
    %612 = vmatprep.mubr.f32.mxu0 0.0
    %613 = vmatmul.mubr.f32.gmra.mrb[0].mxu0 %v247
    %v614 = vpop.f32.mrb[0].mxu0
    %v615 = vadd.f32 0.0, %v614
    %v616 = vpop.f32.mrb[0].mxu0
    %617 = vmatprep.mubr.f32.mxu0 0.0
    %618 = vmatmul.mubr.f32.gmra.mrb[0].mxu0 %v250
    %v619 = vpop.f32.mrb[0].mxu0
    %v620 = vadd.f32 0.0, %v619
    %v621 = vpop.f32.mrb[0].mxu0
    %622 = vmatprep.mubr.f32.mxu0 0.0
    %623 = vmatmul.mubr.f32.gmra.mrb[0].mxu0 %v253
    %v624 = vpop.f32.mrb[0].mxu0
    %v625 = vadd.f32 0.0, %v624
    %v626 = vpop.f32.mrb[0].mxu0
    %627 = vmatprep.mubr.f32.mxu0 0.0
    %628 = vmatmul.mubr.f32.gmra.mrb[0].mxu0 %v256
    %v629 = vpop.f32.mrb[0].mxu0
    %v630 = vadd.f32 0.0, %v629
    %v631 = vpop.f32.mrb[0].mxu0
    %632 = vmatprep.mubr.f32.mxu0 0.0
    %633 = vmatmul.mubr.f32.gmra.mrb[0].mxu0 %v259
    %v634 = vpop.f32.mrb[0].mxu0
    %v635 = vadd.f32 0.0, %v634
    %v636 = vpop.f32.mrb[0].mxu0
    %637 = vmatprep.mubr.f32.mxu0 0.0
    %638 = vmatmul.mubr.f32.gmra.mrb[0].mxu0 %v262
    %v639 = vpop.f32.mrb[0].mxu0
    %v640 = vadd.f32 0.0, %v639
    %v641 = vpop.f32.mrb[0].mxu0
    %642 = vmatprep.mubr.f32.mxu0 0.0
    %643 = vmatmul.mubr.f32.gmra.mrb[0].mxu0 %v265
    %v644 = vpop.f32.mrb[0].mxu0
    %v645 = vadd.f32 0.0, %v644
    %v646 = vpop.f32.mrb[0].mxu0
    %647 = vmatprep.mubr.f32.mxu0 0.0
    %648 = vmatmul.mubr.f32.gmra.mrb[0].mxu0 %v268
    %v649 = vpop.f32.mrb[0].mxu0
    %v650 = vadd.f32 0.0, %v649
    %v651 = vpop.f32.mrb[0].mxu0
    %652 = vmatprep.mubr.f32.mxu0 0.0
    %653 = vmatmul.mubr.f32.gmra.mrb[0].mxu0 %v271
    %v654 = vpop.f32.mrb[0].mxu0
    %v655 = vadd.f32 0.0, %v654
    %v656 = vpop.f32.mrb[0].mxu0
    %657 = vdwg.mxu0
    %658 = vst [vmem:[#allocation2] sm:$0xff] %v340
    %659 = vst [vmem:[#allocation2 + $0x8] sm:$0xff] %v345
    %660 = vst [vmem:[#allocation2 + $0x10] sm:$0xff] %v350
    %661 = vst [vmem:[#allocation2 + $0x18] sm:$0xff] %v355
    %662 = vst [vmem:[#allocation2 + $0x20] sm:$0xff] %v360
    %663 = vst [vmem:[#allocation2 + $0x28] sm:$0xff] %v365
    %664 = vst [vmem:[#allocation2 + $0x30] sm:$0xff] %v370
    %665 = vst [vmem:[#allocation2 + $0x38] sm:$0xff] %v375
    %666 = vst [vmem:[#allocation2 + $0x40] sm:$0xff] %v380
    %667 = vst [vmem:[#allocation2 + $0x48] sm:$0xff] %v385
    %668 = vst [vmem:[#allocation2 + $0x50] sm:$0xff] %v390
    %669 = vst [vmem:[#allocation2 + $0x58] sm:$0xff] %v395
    %670 = vst [vmem:[#allocation2 + $0x60] sm:$0xff] %v400
    %671 = vst [vmem:[#allocation2 + $0x68] sm:$0xff] %v405
    %672 = vst [vmem:[#allocation2 + $0x70] sm:$0xff] %v410
    %673 = vst [vmem:[#allocation2 + $0x78] sm:$0xff] %v415
    %674 = vst [vmem:[#allocation2 + $0x80] sm:$0xff] %v420
    %675 = vst [vmem:[#allocation2 + $0x88] sm:$0xff] %v425
    %676 = vst [vmem:[#allocation2 + $0x90] sm:$0xff] %v430
    %677 = vst [vmem:[#allocation2 + $0x98] sm:$0xff] %v435
    %678 = vst [vmem:[#allocation2 + $0xa0] sm:$0xff] %v440
    %679 = vst [vmem:[#allocation2 + $0xa8] sm:$0xff] %v445
    %680 = vst [vmem:[#allocation2 + $0xb0] sm:$0xff] %v450
    %681 = vst [vmem:[#allocation2 + $0xb8] sm:$0xff] %v455
    %682 = vst [vmem:[#allocation2 + $0xc0] sm:$0xff] %v460
    %683 = vst [vmem:[#allocation2 + $0xc8] sm:$0xff] %v465
    %684 = vst [vmem:[#allocation2 + $0xd0] sm:$0xff] %v470
    %685 = vst [vmem:[#allocation2 + $0xd8] sm:$0xff] %v475
    %686 = vst [vmem:[#allocation2 + $0xe0] sm:$0xff] %v480
    %687 = vst [vmem:[#allocation2 + $0xe8] sm:$0xff] %v485
    %688 = vst [vmem:[#allocation2 + $0xf0] sm:$0xff] %v490
    %689 = vst [vmem:[#allocation2 + $0xf8] sm:$0xff] %v495
    %690 = vst [vmem:[#allocation2 + $0x100] sm:$0xff] %v500
    %691 = vst [vmem:[#allocation2 + $0x108] sm:$0xff] %v505
    %692 = vst [vmem:[#allocation2 + $0x110] sm:$0xff] %v510
    %693 = vst [vmem:[#allocation2 + $0x118] sm:$0xff] %v515
    %694 = vst [vmem:[#allocation2 + $0x120] sm:$0xff] %v520
    %695 = vst [vmem:[#allocation2 + $0x128] sm:$0xff] %v525
    %696 = vst [vmem:[#allocation2 + $0x130] sm:$0xff] %v530
    %697 = vst [vmem:[#allocation2 + $0x138] sm:$0xff] %v535
    %698 = vst [vmem:[#allocation2 + $0x140] sm:$0xff] %v540
    %699 = vst [vmem:[#allocation2 + $0x148] sm:$0xff] %v545
    %700 = vst [vmem:[#allocation2 + $0x150] sm:$0xff] %v550
    %701 = vst [vmem:[#allocation2 + $0x158] sm:$0xff] %v555
    %702 = vst [vmem:[#allocation2 + $0x160] sm:$0xff] %v560
    %703 = vst [vmem:[#allocation2 + $0x168] sm:$0xff] %v565
    %704 = vst [vmem:[#allocation2 + $0x170] sm:$0xff] %v570
    %705 = vst [vmem:[#allocation2 + $0x178] sm:$0xff] %v575
    %706 = vst [vmem:[#allocation2 + $0x180] sm:$0xff] %v580
    %707 = vst [vmem:[#allocation2 + $0x188] sm:$0xff] %v585
    %708 = vst [vmem:[#allocation2 + $0x190] sm:$0xff] %v590
    %709 = vst [vmem:[#allocation2 + $0x198] sm:$0xff] %v595
    %710 = vst [vmem:[#allocation2 + $0x1a0] sm:$0xff] %v600
    %711 = vst [vmem:[#allocation2 + $0x1a8] sm:$0xff] %v605
    %712 = vst [vmem:[#allocation2 + $0x1b0] sm:$0xff] %v610
    %713 = vst [vmem:[#allocation2 + $0x1b8] sm:$0xff] %v615
    %714 = vst [vmem:[#allocation2 + $0x1c0] sm:$0xff] %v620
    %715 = vst [vmem:[#allocation2 + $0x1c8] sm:$0xff] %v625
    %716 = vst [vmem:[#allocation2 + $0x1d0] sm:$0xff] %v630
    %717 = vst [vmem:[#allocation2 + $0x1d8] sm:$0xff] %v635
    %718 = vst [vmem:[#allocation2 + $0x1e0] sm:$0xff] %v640
    %719 = vst [vmem:[#allocation2 + $0x1e8] sm:$0xff] %v645
    %720 = vst [vmem:[#allocation2 + $0x1f0] sm:$0xff] %v650
    %721 = vst [vmem:[#allocation2 + $0x1f8] sm:$0xff] %v655
    %v722 = vadd.f32 %v340, %v345
    %v723 = vadd.f32 %v722, %v350
    %v724 = vadd.f32 %v723, %v355
    %v725 = vadd.f32 %v724, %v360
    %v726 = vadd.f32 %v725, %v365
    %v727 = vadd.f32 %v726, %v370
    %v728 = vadd.f32 %v727, %v375
    %v729 = vadd.f32 %v728, %v380
    %v730 = vadd.f32 %v729, %v385
    %v731 = vadd.f32 %v730, %v390
    %v732 = vadd.f32 %v731, %v395
    %v733 = vadd.f32 %v732, %v400
    %v734 = vadd.f32 %v733, %v405
    %v735 = vadd.f32 %v734, %v410
    %v736 = vadd.f32 %v735, %v415
    %v737 = vadd.f32 %v736, %v420
    %v738 = vadd.f32 %v737, %v425
    %v739 = vadd.f32 %v738, %v430
    %v740 = vadd.f32 %v739, %v435
    %v741 = vadd.f32 %v740, %v440
    %v742 = vadd.f32 %v741, %v445
    %v743 = vadd.f32 %v742, %v450
    %v744 = vadd.f32 %v743, %v455
    %v745 = vadd.f32 %v744, %v460
    %v746 = vadd.f32 %v745, %v465
    %v747 = vadd.f32 %v746, %v470
    %v748 = vadd.f32 %v747, %v475
    %v749 = vadd.f32 %v748, %v480
    %v750 = vadd.f32 %v749, %v485
    %v751 = vadd.f32 %v750, %v490
    %v752 = vadd.f32 %v751, %v495
    %v753 = vadd.f32 %v752, %v500
    %v754 = vadd.f32 %v753, %v505
    %v755 = vadd.f32 %v754, %v510
    %v756 = vadd.f32 %v755, %v515
    %v757 = vadd.f32 %v756, %v520
    %v758 = vadd.f32 %v757, %v525
    %v759 = vadd.f32 %v758, %v530
    %v760 = vadd.f32 %v759, %v535
    %v761 = vadd.f32 %v760, %v540
    %v762 = vadd.f32 %v761, %v545
    %v763 = vadd.f32 %v762, %v550
    %v764 = vadd.f32 %v763, %v555
    %v765 = vadd.f32 %v764, %v560
    %v766 = vadd.f32 %v765, %v565
    %v767 = vadd.f32 %v766, %v570
    %v768 = vadd.f32 %v767, %v575
    %v769 = vadd.f32 %v768, %v580
    %v770 = vadd.f32 %v769, %v585
    %v771 = vadd.f32 %v770, %v590
    %v772 = vadd.f32 %v771, %v595
    %v773 = vadd.f32 %v772, %v600
    %v774 = vadd.f32 %v773, %v605
    %v775 = vadd.f32 %v774, %v610
    %v776 = vadd.f32 %v775, %v615
    %v777 = vadd.f32 %v776, %v620
    %v778 = vadd.f32 %v777, %v625
    %v779 = vadd.f32 %v778, %v630
    %v780 = vadd.f32 %v779, %v635
    %v781 = vadd.f32 %v780, %v640
    %v782 = vadd.f32 %v781, %v645
    %v783 = vadd.f32 %v782, %v650
    %v784 = vadd.f32 %v783, %v655
    %v785 = vrot.slane %v784, 4
    %v786 = vadd.f32 %v784, %v785
    %v787 = vrot.slane %v786, 2
    %v788 = vadd.f32 %v786, %v787
    %v789 = vrot.slane %v788, 1
    %v790 = vadd.f32 %v788, %v789
    %791 = vst [vmem:[#allocation4] sm:$0x1] %v790
    %v792 = vmul.f32 %v340, %v340
    %v793 = vmul.f32 %v345, %v345
    %v794 = vmul.f32 %v350, %v350
    %v795 = vmul.f32 %v355, %v355
    %v796 = vmul.f32 %v360, %v360
    %v797 = vmul.f32 %v365, %v365
    %v798 = vmul.f32 %v370, %v370
    %v799 = vmul.f32 %v375, %v375
    %v800 = vmul.f32 %v380, %v380
    %v801 = vmul.f32 %v385, %v385
    %v802 = vmul.f32 %v390, %v390
    %v803 = vmul.f32 %v395, %v395
    %v804 = vmul.f32 %v400, %v400
    %v805 = vmul.f32 %v405, %v405
    %v806 = vmul.f32 %v410, %v410
    %v807 = vmul.f32 %v415, %v415
    %v808 = vmul.f32 %v420, %v420
    %v809 = vmul.f32 %v425, %v425
    %v810 = vmul.f32 %v430, %v430
    %v811 = vmul.f32 %v435, %v435
    %v812 = vmul.f32 %v440, %v440
    %v813 = vmul.f32 %v445, %v445
    %v814 = vmul.f32 %v450, %v450
    %v815 = vmul.f32 %v455, %v455
    %v816 = vmul.f32 %v460, %v460
    %v817 = vmul.f32 %v465, %v465
    %v818 = vmul.f32 %v470, %v470
    %v819 = vmul.f32 %v475, %v475
    %v820 = vmul.f32 %v480, %v480
    %v821 = vmul.f32 %v485, %v485
    %v822 = vmul.f32 %v490, %v490
    %v823 = vmul.f32 %v495, %v495
    %v824 = vmul.f32 %v500, %v500
    %v825 = vmul.f32 %v505, %v505
    %v826 = vmul.f32 %v510, %v510
    %v827 = vmul.f32 %v515, %v515
    %v828 = vmul.f32 %v520, %v520
    %v829 = vmul.f32 %v525, %v525
    %v830 = vmul.f32 %v530, %v530
    %v831 = vmul.f32 %v535, %v535
    %v832 = vmul.f32 %v540, %v540
    %v833 = vmul.f32 %v545, %v545
    %v834 = vmul.f32 %v550, %v550
    %v835 = vmul.f32 %v555, %v555
    %v836 = vmul.f32 %v560, %v560
    %v837 = vmul.f32 %v565, %v565
    %v838 = vmul.f32 %v570, %v570
    %v839 = vmul.f32 %v575, %v575
    %v840 = vmul.f32 %v580, %v580
    %v841 = vmul.f32 %v585, %v585
    %v842 = vmul.f32 %v590, %v590
    %v843 = vmul.f32 %v595, %v595
    %v844 = vmul.f32 %v600, %v600
    %v845 = vmul.f32 %v605, %v605
    %v846 = vmul.f32 %v610, %v610
    %v847 = vmul.f32 %v615, %v615
    %v848 = vmul.f32 %v620, %v620
    %v849 = vmul.f32 %v625, %v625
    %v850 = vmul.f32 %v630, %v630
    %v851 = vmul.f32 %v635, %v635
    %v852 = vmul.f32 %v640, %v640
    %v853 = vmul.f32 %v645, %v645
    %v854 = vmul.f32 %v650, %v650
    %v855 = vmul.f32 %v655, %v655
    %v856 = vadd.f32 %v792, %v793
    %v857 = vadd.f32 %v856, %v794
    %v858 = vadd.f32 %v857, %v795
    %v859 = vadd.f32 %v858, %v796
    %v860 = vadd.f32 %v859, %v797
    %v861 = vadd.f32 %v860, %v798
    %v862 = vadd.f32 %v861, %v799
    %v863 = vadd.f32 %v862, %v800
    %v864 = vadd.f32 %v863, %v801
    %v865 = vadd.f32 %v864, %v802
    %v866 = vadd.f32 %v865, %v803
    %v867 = vadd.f32 %v866, %v804
    %v868 = vadd.f32 %v867, %v805
    %v869 = vadd.f32 %v868, %v806
    %v870 = vadd.f32 %v869, %v807
    %v871 = vadd.f32 %v870, %v808
    %v872 = vadd.f32 %v871, %v809
    %v873 = vadd.f32 %v872, %v810
    %v874 = vadd.f32 %v873, %v811
    %v875 = vadd.f32 %v874, %v812
    %v876 = vadd.f32 %v875, %v813
    %v877 = vadd.f32 %v876, %v814
    %v878 = vadd.f32 %v877, %v815
    %v879 = vadd.f32 %v878, %v816
    %v880 = vadd.f32 %v879, %v817
    %v881 = vadd.f32 %v880, %v818
    %v882 = vadd.f32 %v881, %v819
    %v883 = vadd.f32 %v882, %v820
    %v884 = vadd.f32 %v883, %v821
    %v885 = vadd.f32 %v884, %v822
    %v886 = vadd.f32 %v885, %v823
    %v887 = vadd.f32 %v886, %v824
    %v888 = vadd.f32 %v887, %v825
    %v889 = vadd.f32 %v888, %v826
    %v890 = vadd.f32 %v889, %v827
    %v891 = vadd.f32 %v890, %v828
    %v892 = vadd.f32 %v891, %v829
    %v893 = vadd.f32 %v892, %v830
    %v894 = vadd.f32 %v893, %v831
    %v895 = vadd.f32 %v894, %v832
    %v896 = vadd.f32 %v895, %v833
    %v897 = vadd.f32 %v896, %v834
    %v898 = vadd.f32 %v897, %v835
    %v899 = vadd.f32 %v898, %v836
    %v900 = vadd.f32 %v899, %v837
    %v901 = vadd.f32 %v900, %v838
    %v902 = vadd.f32 %v901, %v839
    %v903 = vadd.f32 %v902, %v840
    %v904 = vadd.f32 %v903, %v841
    %v905 = vadd.f32 %v904, %v842
    %v906 = vadd.f32 %v905, %v843
    %v907 = vadd.f32 %v906, %v844
    %v908 = vadd.f32 %v907, %v845
    %v909 = vadd.f32 %v908, %v846
    %v910 = vadd.f32 %v909, %v847
    %v911 = vadd.f32 %v910, %v848
    %v912 = vadd.f32 %v911, %v849
    %v913 = vadd.f32 %v912, %v850
    %v914 = vadd.f32 %v913, %v851
    %v915 = vadd.f32 %v914, %v852
    %v916 = vadd.f32 %v915, %v853
    %v917 = vadd.f32 %v916, %v854
    %v918 = vadd.f32 %v917, %v855
    %v919 = vrot.slane %v918, 4
    %v920 = vadd.f32 %v918, %v919
    %v921 = vrot.slane %v920, 2
    %v922 = vadd.f32 %v920, %v921
    %v923 = vrot.slane %v922, 1
    %v924 = vadd.f32 %v922, %v923
    %925 = vst [vmem:[#allocation4 + $0x1] sm:$0x1] %v924
    // Predicated region
    $region10: #{tpu_custom_call.1} parent=1 // pred_check
      _
    $region11: #{tpu_custom_call.1} parent=1 // pred_check_branch
      %927 = sbr.rel (0) target = $region13
    $region12: #{tpu_custom_call.1} parent=1 // pred_region
      %s929 = ssub.s32 8192, 8192
      %930 = vsyncadd [#allocation3], %s929
      %s931 = sshll.u32 [#allocation2], 4
      %s932 = int_to_ptr.vmem [resolvable:$true] %s931
      %937 = dma.vmem_to_hbm [thread:$0]  %s932, 8192, %s2, [#allocation3], 128, 128, 8
    $region13: #{tpu_custom_call.1} parent=1 // pred_fallthru
      _
    // Predicated region
    $region14: #{tpu_custom_call.1} parent=1 // pred_check
      _
    $region15: #{tpu_custom_call.1} parent=1 // pred_check_branch
      %939 = sbr.rel (0) target = $region17
    $region16: #{tpu_custom_call.1} parent=1 // pred_region
      %s941 = ssub.s32 32, 32
      %942 = vsyncadd [#allocation5], %s941
      %s944 = sshll.u32 [#allocation4], 4
      %s945 = int_to_ptr.vmem [resolvable:$true] %s944
      %947 = dma.vmem_to_hbm [thread:$0]  %s945, 32, %s3, [#allocation5]
    $region17: #{tpu_custom_call.1} parent=1 // pred_fallthru
      _
    // Predicated region
    $region18: #{tpu_custom_call.1} parent=1 // pred_check
      _
    $region19: #{tpu_custom_call.1} parent=1 // pred_check_branch
      %949 = sbr.rel (0) target = $region21
    $region20: #{tpu_custom_call.1} parent=1 // pred_region
      %950 = dma.done [#allocation3], 8192
    $region21: #{tpu_custom_call.1} parent=1 // pred_fallthru
      _
    // Predicated region
    $region22: #{tpu_custom_call.1} parent=1 // pred_check
      _
    $region23: #{tpu_custom_call.1} parent=1 // pred_check_branch
      %952 = sbr.rel (0) target = $region25
    $region24: #{tpu_custom_call.1} parent=1 // pred_region
      %953 = dma.done [#allocation5], 32
    $region25: #{tpu_custom_call.1} parent=1 // pred_fallthru
      _
    %954 = vsyncpa [#allocation3], 1
    %955 = vsyncpa [#allocation5], 1

</llo_original>
